<compile_context>
chip_gen: v5e
topology: v5e:2x2
jax: 0.10.0
libtpu: 0.0.40
codegen_flags: <defaults>
</compile_context>

<pallas_src>
import math

import jax
import jax.numpy as jnp
from jax.experimental import pallas as pl
from jax.experimental.pallas import tpu as pltpu


def _round_up(x: int, m: int) -> int:
    return ((x + m - 1) // m) * m


def make_resnet_forward(depth_p: int, pbs: float, *, block_batch: int = 256,
                        unroll_depth_threshold: int = 8,
                        vmem_limit_bytes: int = 32 * 1024 * 1024):
    """Builds a batch-tiled Pallas forward pass for the ResNet module."""
    sqrt_pbs = float(math.sqrt(pbs))

    def kernel(x_ref, win_ref, bin_ref, wh_ref, bh_ref, wout_ref, bout_ref, o_ref):
        # x tile: (TB, d_in) f32. Matmul operands go to the MXU in bf16;
        # accumulation and all elementwise math stay in f32.
        x = x_ref[...]

        # linearIn
        h = jnp.dot(x.astype(jnp.bfloat16), win_ref[...],
                    preferred_element_type=jnp.float32) + bin_ref[...]

        # depth_p residual blocks: h = relu(h @ W + b) + h
        def block(d, h):
            t = jnp.dot(h.astype(jnp.bfloat16), wh_ref[d],
                        preferred_element_type=jnp.float32) + bh_ref[d]
            return jnp.maximum(t, 0.0) + h

        if depth_p <= unroll_depth_threshold:
            for d in range(depth_p):                      # small depth: unrolled
                h = block(d, h)
        else:
            h = jax.lax.fori_loop(0, depth_p, block, h)   # bounded live ranges

        # linearOut
        y = jnp.dot(h.astype(jnp.bfloat16), wout_ref[...],
                    preferred_element_type=jnp.float32) + bout_ref[...]

        # y / ||y||_2 * sqrt(Pbs): rsqrt rides the EUP slot, one VPU multiply.
        # Padded output lanes are exactly zero, so they don't change the norm.
        inv = jax.lax.rsqrt(jnp.sum(y * y, axis=1, keepdims=True))
        o_ref[...] = y * (inv * sqrt_pbs)

    def forward(x, params):
        win, bin_, wh, bh, wout, bout = params
        B, d_in = x.shape
        width = win.shape[1]
        d_out = wout.shape[1]

        # Lane-dense zero padding of hidden / output feature dims (to 128).
        wp = _round_up(width, 128)
        dp = _round_up(d_out, 128)
        win_p = jnp.pad(win, ((0, 0), (0, wp - width))).astype(jnp.bfloat16)
        bin_p = jnp.pad(bin_, ((0, 0), (0, wp - width)))
        wh_p = jnp.pad(wh, ((0, 0), (0, wp - width), (0, wp - width))).astype(jnp.bfloat16)
        bh_p = jnp.pad(bh, ((0, 0), (0, 0), (0, wp - width)))
        wout_p = jnp.pad(wout, ((0, wp - width), (0, dp - d_out))).astype(jnp.bfloat16)
        bout_p = jnp.pad(bout, ((0, 0), (0, dp - d_out)))

        # Batch tiling: TB rows per grid step (multiple of 8 sublanes).
        tb = min(block_batch, _round_up(B, 8))
        b_pad = _round_up(B, tb)
        x_p = jnp.pad(x, ((0, b_pad - B), (0, 0)))
        grid = (pl.cdiv(b_pad, tb),)

        const2 = lambda i: (0, 0)
        const3 = lambda i: (0, 0, 0)
        out = pl.pallas_call(
            kernel,
            out_shape=jax.ShapeDtypeStruct((b_pad, dp), jnp.float32),
            grid=grid,
            in_specs=[
                pl.BlockSpec((tb, d_in), lambda i: (i, 0)),        # x tile
                pl.BlockSpec((d_in, wp), const2),                  # W_in (resident)
                pl.BlockSpec((1, wp), const2),                     # b_in
                pl.BlockSpec((depth_p, wp, wp), const3),           # W_hidden
                pl.BlockSpec((depth_p, 1, wp), const3),            # b_hidden
                pl.BlockSpec((wp, dp), const2),                    # W_out
                pl.BlockSpec((1, dp), const2),                     # b_out
            ],
            out_specs=pl.BlockSpec((tb, dp), lambda i: (i, 0)),
            compiler_params=pltpu.CompilerParams(
                dimension_semantics=("parallel",),
                vmem_limit_bytes=vmem_limit_bytes,
            ),
        )(x_p, win_p, bin_p, wh_p, bh_p, wout_p, bout_p)

        # Drop batch padding rows (they may be NaN from a zero norm, same as
        # the PyTorch module would give for an all-zero row) and lane padding.
        return out[:B, :d_out]

    return forward


def init_params(key, d_in, width, depth, d_out):
    """PyTorch-Linear-style init (uniform +/- 1/sqrt(fan_in)).

    Weights are [in, out] (transposed vs. torch Linear.weight); biases are 2-D
    ([1, out]) for TPU-friendly layouts.
    """
    ks = jax.random.split(key, 6)

    def uni(k, shape, fan_in):
        bound = 1.0 / math.sqrt(fan_in)
        return jax.random.uniform(k, shape, jnp.float32, -bound, bound)

    win = uni(ks[0], (d_in, width), d_in)
    bin_ = uni(ks[1], (1, width), d_in)
    wh = uni(ks[2], (depth, width, width), width)
    bh = uni(ks[3], (depth, 1, width), width)
    wout = uni(ks[4], (width, d_out), width)
    bout = uni(ks[5], (1, d_out), width)
    return win, bin_, wh, bh, wout, bout


def reference_forward(x, params, depth, pbs):
    """Pure-JAX f32 reference mirroring the PyTorch module."""
    win, bin_, wh, bh, wout, bout = params
    h = x @ win + bin_
    for d in range(depth):
        h = jnp.maximum(h @ wh[d] + bh[d], 0.0) + h
    y = h @ wout + bout
    power = jnp.linalg.norm(y, axis=1, keepdims=True)
    return y / power * math.sqrt(pbs)


if __name__ == "__main__":
    # Small args consistent with the forward: Ns=4, K=2, J=2, width_p=32,
    # depth_p=3, Pbs=2.0, batch=8.
    Ns, K, J = 4, 2, 2
    width_p, depth_p = 32, 3
    Pbs = 2.0
    batch = 8

    d_in = Ns * (K + J) * 2   # 32
    d_out = Ns * 2            # 8

    key = jax.random.PRNGKey(0)
    k_x, k_p = jax.random.split(key)
    x = jax.random.normal(k_x, (batch, d_in), jnp.float32)
    params = init_params(k_p, d_in, width_p, depth_p, d_out)

    fwd = make_resnet_forward(depth_p, Pbs)
    out = jax.block_until_ready(fwd(x, params))

    ref = reference_forward(x, params, depth_p, Pbs)
    assert out.shape == (batch, d_out)
    # bf16 MXU operands with f32 accumulation: allow a few percent slack vs.
    # the pure-f32 reference.
    assert jnp.allclose(out, ref, atol=3e-2, rtol=3e-2), float(
        jnp.max(jnp.abs(out - ref)))

    print("KERNEL_OK")
</pallas_src>

<mosaic_0001>
module attributes {stable_mosaic.version = 11 : i64} {
  func.func @kernel(%arg0: i32, %arg1: memref<8x32xf32, #tpu.memory_space<vmem>>, %arg2: memref<32x128xbf16, #tpu.memory_space<vmem>>, %arg3: memref<1x128xf32, #tpu.memory_space<vmem>>, %arg4: memref<3x128x128xbf16, #tpu.memory_space<vmem>>, %arg5: memref<3x1x128xf32, #tpu.memory_space<vmem>>, %arg6: memref<128x128xbf16, #tpu.memory_space<vmem>>, %arg7: memref<1x128xf32, #tpu.memory_space<vmem>>, %arg8: memref<8x128xf32, #tpu.memory_space<vmem>>) attributes {dimension_semantics = [#tpu.dimension_semantics<parallel>], iteration_bounds = array<i64: 1>, scalar_prefetch = 0 : i64, scratch_operands = 0 : i64, tpu.core_type = #tpu.core_type<tc>, window_params = [{transform_indices = @transform_0, window_bounds = array<i64: 8, 32>}, {pipeline_mode = #tpu.pipeline_mode<synchronous>, transform_indices = @transform_1, window_bounds = array<i64: 32, 128>}, {pipeline_mode = #tpu.pipeline_mode<synchronous>, transform_indices = @transform_2, window_bounds = array<i64: 1, 128>}, {pipeline_mode = #tpu.pipeline_mode<synchronous>, transform_indices = @transform_3, window_bounds = array<i64: 3, 128, 128>}, {pipeline_mode = #tpu.pipeline_mode<synchronous>, transform_indices = @transform_4, window_bounds = array<i64: 3, 1, 128>}, {pipeline_mode = #tpu.pipeline_mode<synchronous>, transform_indices = @transform_5, window_bounds = array<i64: 128, 128>}, {pipeline_mode = #tpu.pipeline_mode<synchronous>, transform_indices = @transform_6, window_bounds = array<i64: 1, 128>}, {transform_indices = @transform_7, window_bounds = array<i64: 8, 128>}]} {
    %c0 = arith.constant 0 : index
    %c0_0 = arith.constant 0 : index
    %0 = vector.load %arg1[%c0, %c0_0] : memref<8x32xf32, #tpu.memory_space<vmem>>, vector<8x32xf32>
    %1 = arith.truncf %0 : vector<8x32xf32> to vector<8x32xbf16>
    %c0_1 = arith.constant 0 : index
    %c0_2 = arith.constant 0 : index
    %2 = vector.load %arg2[%c0_1, %c0_2] : memref<32x128xbf16, #tpu.memory_space<vmem>>, vector<32x128xbf16>
    %cst = arith.constant dense<0.000000e+00> : vector<8x128xf32>
    %3 = tpu.matmul %1, %2, %cst {dimension_numbers = #tpu.dot_dimension_numbers<[1], [0], [0], [1], [0, 0, 1, 1], [], []>} : vector<8x32xbf16>, vector<32x128xbf16>, vector<8x128xf32> -> vector<8x128xf32>
    %c0_3 = arith.constant 0 : index
    %c0_4 = arith.constant 0 : index
    %4 = vector.load %arg3[%c0_3, %c0_4] : memref<1x128xf32, #tpu.memory_space<vmem>>, vector<1x128xf32>
    %5 = vector.broadcast %4 : vector<1x128xf32> to vector<8x128xf32>
    %6 = arith.addf %3, %5 : vector<8x128xf32>
    %7 = arith.truncf %6 : vector<8x128xf32> to vector<8x128xbf16>
    %c0_5 = arith.constant 0 : index
    %c0_6 = arith.constant 0 : index
    %c0_7 = arith.constant 0 : index
    %8 = vector.load %arg4[%c0_5, %c0_6, %c0_7] : memref<3x128x128xbf16, #tpu.memory_space<vmem>>, vector<1x128x128xbf16>
    %9 = vector.shape_cast %8 : vector<1x128x128xbf16> to vector<128x128xbf16>
    %cst_8 = arith.constant dense<0.000000e+00> : vector<8x128xf32>
    %10 = tpu.matmul %7, %9, %cst_8 {dimension_numbers = #tpu.dot_dimension_numbers<[1], [0], [0], [1], [0, 0, 1, 1], [], []>} : vector<8x128xbf16>, vector<128x128xbf16>, vector<8x128xf32> -> vector<8x128xf32>
    %c0_9 = arith.constant 0 : index
    %c0_10 = arith.constant 0 : index
    %c0_11 = arith.constant 0 : index
    %11 = vector.load %arg5[%c0_9, %c0_10, %c0_11] : memref<3x1x128xf32, #tpu.memory_space<vmem>>, vector<1x1x128xf32>
    %12 = vector.shape_cast %11 : vector<1x1x128xf32> to vector<1x128xf32>
    %13 = vector.broadcast %12 : vector<1x128xf32> to vector<8x128xf32>
    %14 = arith.addf %10, %13 : vector<8x128xf32>
    %cst_12 = arith.constant 0.000000e+00 : f32
    %15 = vector.broadcast %cst_12 : f32 to vector<8x128xf32>
    %16 = arith.maximumf %14, %15 : vector<8x128xf32>
    %17 = arith.addf %16, %6 : vector<8x128xf32>
    %18 = arith.truncf %17 : vector<8x128xf32> to vector<8x128xbf16>
    %c1 = arith.constant 1 : index
    %c0_13 = arith.constant 0 : index
    %c0_14 = arith.constant 0 : index
    %19 = vector.load %arg4[%c1, %c0_13, %c0_14] : memref<3x128x128xbf16, #tpu.memory_space<vmem>>, vector<1x128x128xbf16>
    %20 = vector.shape_cast %19 : vector<1x128x128xbf16> to vector<128x128xbf16>
    %cst_15 = arith.constant dense<0.000000e+00> : vector<8x128xf32>
    %21 = tpu.matmul %18, %20, %cst_15 {dimension_numbers = #tpu.dot_dimension_numbers<[1], [0], [0], [1], [0, 0, 1, 1], [], []>} : vector<8x128xbf16>, vector<128x128xbf16>, vector<8x128xf32> -> vector<8x128xf32>
    %c1_16 = arith.constant 1 : index
    %c0_17 = arith.constant 0 : index
    %c0_18 = arith.constant 0 : index
    %22 = vector.load %arg5[%c1_16, %c0_17, %c0_18] : memref<3x1x128xf32, #tpu.memory_space<vmem>>, vector<1x1x128xf32>
    %23 = vector.shape_cast %22 : vector<1x1x128xf32> to vector<1x128xf32>
    %24 = vector.broadcast %23 : vector<1x128xf32> to vector<8x128xf32>
    %25 = arith.addf %21, %24 : vector<8x128xf32>
    %cst_19 = arith.constant 0.000000e+00 : f32
    %26 = vector.broadcast %cst_19 : f32 to vector<8x128xf32>
    %27 = arith.maximumf %25, %26 : vector<8x128xf32>
    %28 = arith.addf %27, %17 : vector<8x128xf32>
    %29 = arith.truncf %28 : vector<8x128xf32> to vector<8x128xbf16>
    %c2 = arith.constant 2 : index
    %c0_20 = arith.constant 0 : index
    %c0_21 = arith.constant 0 : index
    %30 = vector.load %arg4[%c2, %c0_20, %c0_21] : memref<3x128x128xbf16, #tpu.memory_space<vmem>>, vector<1x128x128xbf16>
    %31 = vector.shape_cast %30 : vector<1x128x128xbf16> to vector<128x128xbf16>
    %cst_22 = arith.constant dense<0.000000e+00> : vector<8x128xf32>
    %32 = tpu.matmul %29, %31, %cst_22 {dimension_numbers = #tpu.dot_dimension_numbers<[1], [0], [0], [1], [0, 0, 1, 1], [], []>} : vector<8x128xbf16>, vector<128x128xbf16>, vector<8x128xf32> -> vector<8x128xf32>
    %c2_23 = arith.constant 2 : index
    %c0_24 = arith.constant 0 : index
    %c0_25 = arith.constant 0 : index
    %33 = vector.load %arg5[%c2_23, %c0_24, %c0_25] : memref<3x1x128xf32, #tpu.memory_space<vmem>>, vector<1x1x128xf32>
    %34 = vector.shape_cast %33 : vector<1x1x128xf32> to vector<1x128xf32>
    %35 = vector.broadcast %34 : vector<1x128xf32> to vector<8x128xf32>
    %36 = arith.addf %32, %35 : vector<8x128xf32>
    %cst_26 = arith.constant 0.000000e+00 : f32
    %37 = vector.broadcast %cst_26 : f32 to vector<8x128xf32>
    %38 = arith.maximumf %36, %37 : vector<8x128xf32>
    %39 = arith.addf %38, %28 : vector<8x128xf32>
    %40 = arith.truncf %39 : vector<8x128xf32> to vector<8x128xbf16>
    %c0_27 = arith.constant 0 : index
    %c0_28 = arith.constant 0 : index
    %41 = vector.load %arg6[%c0_27, %c0_28] : memref<128x128xbf16, #tpu.memory_space<vmem>>, vector<128x128xbf16>
    %cst_29 = arith.constant dense<0.000000e+00> : vector<8x128xf32>
    %42 = tpu.matmul %40, %41, %cst_29 {dimension_numbers = #tpu.dot_dimension_numbers<[1], [0], [0], [1], [0, 0, 1, 1], [], []>} : vector<8x128xbf16>, vector<128x128xbf16>, vector<8x128xf32> -> vector<8x128xf32>
    %c0_30 = arith.constant 0 : index
    %c0_31 = arith.constant 0 : index
    %43 = vector.load %arg7[%c0_30, %c0_31] : memref<1x128xf32, #tpu.memory_space<vmem>>, vector<1x128xf32>
    %44 = vector.broadcast %43 : vector<1x128xf32> to vector<8x128xf32>
    %45 = arith.addf %42, %44 : vector<8x128xf32>
    %46 = arith.mulf %45, %45 : vector<8x128xf32>
    %cst_32 = arith.constant dense<0.000000e+00> : vector<8xf32>
    %47 = vector.multi_reduction <add>, %46, %cst_32 [1] : vector<8x128xf32> to vector<8xf32>
    %48 = vector.shape_cast %47 : vector<8xf32> to vector<8x1xf32>
    %49 = math.rsqrt %48 : vector<8x1xf32>
    %cst_33 = arith.constant 1.41421354 : f32
    %50 = vector.broadcast %cst_33 : f32 to vector<8x1xf32>
    %51 = arith.mulf %49, %50 : vector<8x1xf32>
    %52 = vector.broadcast %51 : vector<8x1xf32> to vector<8x128xf32>
    %53 = arith.mulf %45, %52 : vector<8x128xf32>
    %c0_34 = arith.constant 0 : index
    %c0_35 = arith.constant 0 : index
    %54 = vector.load %arg8[%c0_34, %c0_35] : memref<8x128xf32, #tpu.memory_space<vmem>>, vector<8x128xf32>
    tpu.vector_store %arg8[%c0_34, %c0_35], %53 {strides = array<i32>} : memref<8x128xf32, #tpu.memory_space<vmem>>, vector<8x128xf32>,
    return
  }
  func.func @transform_0(%arg0: i32) -> (i32, i32) {
    %c0_i32 = arith.constant 0 : i32
    %c0_i32_0 = arith.constant 0 : i32
    return %arg0, %c0_i32 : i32, i32
  }
  func.func @transform_1(%arg0: i32) -> (i32, i32) {
    %c0_i32 = arith.constant 0 : i32
    %c0_i32_0 = arith.constant 0 : i32
    %c0_i32_1 = arith.constant 0 : i32
    return %c0_i32, %c0_i32_0 : i32, i32
  }
  func.func @transform_2(%arg0: i32) -> (i32, i32) {
    %c0_i32 = arith.constant 0 : i32
    %c0_i32_0 = arith.constant 0 : i32
    %c0_i32_1 = arith.constant 0 : i32
    return %c0_i32, %c0_i32_0 : i32, i32
  }
  func.func @transform_3(%arg0: i32) -> (i32, i32, i32) {
    %c0_i32 = arith.constant 0 : i32
    %c0_i32_0 = arith.constant 0 : i32
    %c0_i32_1 = arith.constant 0 : i32
    %c0_i32_2 = arith.constant 0 : i32
    return %c0_i32, %c0_i32_0, %c0_i32_1 : i32, i32, i32
  }
  func.func @transform_4(%arg0: i32) -> (i32, i32, i32) {
    %c0_i32 = arith.constant 0 : i32
    %c0_i32_0 = arith.constant 0 : i32
    %c0_i32_1 = arith.constant 0 : i32
    %c0_i32_2 = arith.constant 0 : i32
    return %c0_i32, %c0_i32_0, %c0_i32_1 : i32, i32, i32
  }
  func.func @transform_5(%arg0: i32) -> (i32, i32) {
    %c0_i32 = arith.constant 0 : i32
    %c0_i32_0 = arith.constant 0 : i32
    %c0_i32_1 = arith.constant 0 : i32
    return %c0_i32, %c0_i32_0 : i32, i32
  }
  func.func @transform_6(%arg0: i32) -> (i32, i32) {
    %c0_i32 = arith.constant 0 : i32
    %c0_i32_0 = arith.constant 0 : i32
    %c0_i32_1 = arith.constant 0 : i32
    return %c0_i32, %c0_i32_0 : i32, i32
  }
  func.func @transform_7(%arg0: i32) -> (i32, i32) {
    %c0_i32 = arith.constant 0 : i32
    %c0_i32_0 = arith.constant 0 : i32
    return %arg0, %c0_i32 : i32, i32
  }
}

</mosaic_0001>

<llo_original>
// kernel: tpu_custom_call.1
$region0: #{tpu_custom_call.1}
  #allocation0 [shape = 'u32[]', space=smem, size = 0x4, offset = 0x4, fixed_abs, tag = 'smem constant byte address 0x4 - core index']
  #allocation1 [shape = 'u32[72,128]{1,0:T(1,128)}', space=vmem, size = 0x9000, scoped, tag = 'internal scratch']
  %s0 = inlined_call_operand.hbm [shape: f32[8,32], index: 0, kind: input, shape index: {}]
  %s1 = inlined_call_operand.hbm [shape: bf16[32,128], index: 1, kind: input, shape index: {}]
  %s2 = inlined_call_operand.hbm [shape: f32[1,128], index: 2, kind: input, shape index: {}]
  %s3 = inlined_call_operand.hbm [shape: bf16[3,128,128], index: 3, kind: input, shape index: {}]
  %s4 = inlined_call_operand.vmem [shape: f32[3,1,128], index: 4, kind: input, shape index: {}]
  %s5 = inlined_call_operand.hbm [shape: bf16[128,128], index: 5, kind: input, shape index: {}]
  %s6 = inlined_call_operand.vmem [shape: f32[1,128], index: 6, kind: input, shape index: {}]
  %s7 = inlined_call_operand.hbm [shape: f32[8,128], index: 7, kind: output, shape index: {}]
  %s8 = sld [smem:[#allocation0]]
  $region58: #{tpu_custom_call.1} parent=0
    _
  %s10 = ssub.s32 1, %s8
  %s11 = scalar_select 0, %s10, %s8
  $region1: #{tpu_custom_call.1} parent=0
    #allocation2 [shape = 'u8[4096]{0}', space=vmem, size = 0x1000, scoped, tag = 'input window, operand 0, single buffered']
    #allocation3 [shape = 's32[1]{0}', space=sflag, size = 0x4, scoped, tag = 'scoped memory for tpu_custom_call.1']
    #allocation4 [shape = 's32[1]{0}', space=sflag, size = 0x4, scoped, tag = 'scoped memory for tpu_custom_call.1']
    #allocation5 [shape = 'u8[8192]{0}', space=vmem, size = 0x2000, scoped, tag = 'input window, operand 1, single buffered']
    #allocation6 [shape = 's32[1]{0}', space=sflag, size = 0x4, scoped, tag = 'scoped memory for tpu_custom_call.1']
    #allocation7 [shape = 'u8[512]{0}', space=vmem, size = 0x400, scoped, tag = 'input window, operand 2, single buffered']
    #allocation8 [shape = 'u8[98304]{0}', space=vmem, size = 0x18000, scoped, tag = 'input window, operand 3, single buffered']
    #allocation9 [shape = 's32[1]{0}', space=sflag, size = 0x4, scoped, tag = 'scoped memory for tpu_custom_call.1']
    #allocation10 [shape = 'u8[32768]{0}', space=vmem, size = 0x8000, scoped, tag = 'input window, operand 5, single buffered']
    #allocation11 [shape = 'u8[4096]{0}', space=vmem, size = 0x1000, scoped, tag = 'output window, operand 0, single buffered']
    %12 = vsyncpa [#allocation3], 0
    %13 = vsyncpa [#allocation6], 0
    %14 = vsyncpa [#allocation9], 0
    %15 = vsyncpa [#allocation4], 0
    // Predicated region
    $region2: #{tpu_custom_call.1} parent=1 // pred_check
      _
    $region3: #{tpu_custom_call.1} parent=1 // pred_check_branch
      %17 = sbr.rel (0) target = $region5
    $region4: #{tpu_custom_call.1} parent=1 // pred_region
      %19 = vsyncadd [#allocation3], 0
      %s21 = sshll.u32 %s0, 4
      %s22 = int_to_ptr.hbm [resolvable:$true] %s21
      %s23 = sshll.u32 [#allocation2], 4
      %s24 = int_to_ptr.vmem [resolvable:$true] %s23
      %26 = dma.hbm_to_vmem [thread:$0]  %s22, 128, %s24, [#allocation3]
    $region5: #{tpu_custom_call.1} parent=1 // pred_fallthru
      _
    // Predicated region
    $region6: #{tpu_custom_call.1} parent=1 // pred_check
      _
    $region7: #{tpu_custom_call.1} parent=1 // pred_check_branch
      %28 = sbr.rel (0) target = $region9
    $region8: #{tpu_custom_call.1} parent=1 // pred_region
      %30 = vsyncadd [#allocation6], 0
      %s31 = sshll.u32 %s1, 4
      %s32 = int_to_ptr.hbm [resolvable:$true] %s31
      %s33 = sshll.u32 [#allocation5], 4
      %s34 = int_to_ptr.vmem [resolvable:$true] %s33
      %39 = dma.hbm_to_vmem [thread:$0]  %s32, 256, %s34, [#allocation6], 64, 64, 4
    $region9: #{tpu_custom_call.1} parent=1 // pred_fallthru
      _
    // Predicated region
    $region10: #{tpu_custom_call.1} parent=1 // pred_check
      _
    $region11: #{tpu_custom_call.1} parent=1 // pred_check_branch
      %41 = sbr.rel (0) target = $region13
    $region12: #{tpu_custom_call.1} parent=1 // pred_region
      %43 = vsyncadd [#allocation6], 0
      %s45 = sshll.u32 %s2, 4
      %s46 = int_to_ptr.hbm [resolvable:$true] %s45
      %s47 = sshll.u32 [#allocation7], 4
      %s48 = int_to_ptr.vmem [resolvable:$true] %s47
      %50 = dma.hbm_to_vmem [thread:$0]  %s46, 16, %s48, [#allocation6]
    $region13: #{tpu_custom_call.1} parent=1 // pred_fallthru
      _
    // Predicated region
    $region14: #{tpu_custom_call.1} parent=1 // pred_check
      _
    $region15: #{tpu_custom_call.1} parent=1 // pred_check_branch
      %52 = sbr.rel (0) target = $region17
    $region16: #{tpu_custom_call.1} parent=1 // pred_region
      %54 = vsyncadd [#allocation9], 0
      %s55 = sshll.u32 %s3, 4
      %s56 = int_to_ptr.hbm [resolvable:$true] %s55
      %s57 = sshll.u32 [#allocation8], 4
      %s58 = int_to_ptr.vmem [resolvable:$true] %s57
      %63 = dma.hbm_to_vmem [thread:$0]  %s56, 3072, %s58, [#allocation9], 64, 64, 4
    $region17: #{tpu_custom_call.1} parent=1 // pred_fallthru
      _
    // Predicated region
    $region18: #{tpu_custom_call.1} parent=1 // pred_check
      _
    $region19: #{tpu_custom_call.1} parent=1 // pred_check_branch
      %65 = sbr.rel (0) target = $region21
    $region20: #{tpu_custom_call.1} parent=1 // pred_region
      _
    $region21: #{tpu_custom_call.1} parent=1 // pred_fallthru
      _
    // Predicated region
    $region22: #{tpu_custom_call.1} parent=1 // pred_check
      _
    $region23: #{tpu_custom_call.1} parent=1 // pred_check_branch
      %67 = sbr.rel (0) target = $region25
    $region24: #{tpu_custom_call.1} parent=1 // pred_region
      %69 = vsyncadd [#allocation9], 0
      %s70 = sshll.u32 %s5, 4
      %s71 = int_to_ptr.hbm [resolvable:$true] %s70
      %s72 = sshll.u32 [#allocation10], 4
      %s73 = int_to_ptr.vmem [resolvable:$true] %s72
      %78 = dma.hbm_to_vmem [thread:$0]  %s71, 1024, %s73, [#allocation9], 64, 64, 4
    $region25: #{tpu_custom_call.1} parent=1 // pred_fallthru
      _
    // Predicated region
    $region26: #{tpu_custom_call.1} parent=1 // pred_check
      _
    $region27: #{tpu_custom_call.1} parent=1 // pred_check_branch
      %80 = sbr.rel (0) target = $region29
    $region28: #{tpu_custom_call.1} parent=1 // pred_region
      _
    $region29: #{tpu_custom_call.1} parent=1 // pred_fallthru
      _
    // Predicated region
    $region30: #{tpu_custom_call.1} parent=1 // pred_check
      _
    $region31: #{tpu_custom_call.1} parent=1 // pred_check_branch
      %82 = sbr.rel (0) target = $region33
    $region32: #{tpu_custom_call.1} parent=1 // pred_region
      %84 = dma.done [#allocation3], 128
    $region33: #{tpu_custom_call.1} parent=1 // pred_fallthru
      _
    // Predicated region
    $region34: #{tpu_custom_call.1} parent=1 // pred_check
      _
    $region35: #{tpu_custom_call.1} parent=1 // pred_check_branch
      %86 = sbr.rel (0) target = $region37
    $region36: #{tpu_custom_call.1} parent=1 // pred_region
      %88 = dma.done [#allocation6], 256
    $region37: #{tpu_custom_call.1} parent=1 // pred_fallthru
      _
    // Predicated region
    $region38: #{tpu_custom_call.1} parent=1 // pred_check
      _
    $region39: #{tpu_custom_call.1} parent=1 // pred_check_branch
      %90 = sbr.rel (0) target = $region41
    $region40: #{tpu_custom_call.1} parent=1 // pred_region
      %92 = dma.done [#allocation6], 16
    $region41: #{tpu_custom_call.1} parent=1 // pred_fallthru
      _
    // Predicated region
    $region42: #{tpu_custom_call.1} parent=1 // pred_check
      _
    $region43: #{tpu_custom_call.1} parent=1 // pred_check_branch
      %94 = sbr.rel (0) target = $region45
    $region44: #{tpu_custom_call.1} parent=1 // pred_region
      %96 = dma.done [#allocation9], 3072
    $region45: #{tpu_custom_call.1} parent=1 // pred_fallthru
      _
    // Predicated region
    $region46: #{tpu_custom_call.1} parent=1 // pred_check
      _
    $region47: #{tpu_custom_call.1} parent=1 // pred_check_branch
      %98 = sbr.rel (0) target = $region49
    $region48: #{tpu_custom_call.1} parent=1 // pred_region
      %100 = dma.done [#allocation9], 1024
    $region49: #{tpu_custom_call.1} parent=1 // pred_fallthru
      _
    %v102 = vld [vmem:[#allocation2] sm:$0xff]
    %v103 = vpack.c.bf16 %v102, %v102
    %v104 = vld [vmem:[#allocation5] sm:$0xf]
    %v105 = vld [vmem:[#allocation5 + $0x4] sm:$0xf]
    %v106 = vld [vmem:[#allocation5 + $0x8] sm:$0xf]
    %v107 = vld [vmem:[#allocation5 + $0xc] sm:$0xf]
    %v108 = vld [vmem:[#allocation7] sm:$0x1]
    %v110 = vperm.slane %v108, 0
    %v116 = vunpack.c.l.b16 %v104
    %v117 = vunpack.c.l.b16 %v105
    %v118 = vunpack.c.l.b16 %v106
    %v119 = vunpack.c.l.b16 %v107
    %v120 = vpack.c.b16 %v117, %v116
    %v121 = vpack.c.b16 %v119, %v118
    %vm124 = vcmask 261120
    %v126 = vsel %vm124, %v103, 0
    %128 = vmatpush.bf16.msra.mxu0 0
    %129 = vmatpush.bf16.msra.mxu0 0
    %130 = vmatpush.bf16.msra.mxu0 0
    %131 = vmatpush.bf16.msra.mxu0 0
    %132 = vmatpush.bf16.msra.mxu0 0
    %133 = vmatpush.bf16.msra.mxu0 0
    %134 = vmatpush.bf16.msra.mxu0 %v121
    %135 = vmatpush.bf16.msra.mxu0 %v120
    %136 = vmatmul.bf16.gmra.mxu0 %v126
    %v137 = vpop.f32.mrf.mxu0
    %v138 = vadd.f32 %v110, %v137
    %v139 = vpop.f32.mrf.mxu0
    %140 = vdwg.mxu0
    %v141 = vpack.c.bf16 %v138, %v138
    %v142 = vld [vmem:[#allocation8] sm:$0xf]
    %v143 = vld [vmem:[#allocation8 + $0x4] sm:$0xf]
    %v144 = vld [vmem:[#allocation8 + $0x8] sm:$0xf]
    %v145 = vld [vmem:[#allocation8 + $0xc] sm:$0xf]
    %v146 = vld [vmem:[#allocation8 + $0x10] sm:$0xf]
    %v147 = vld [vmem:[#allocation8 + $0x14] sm:$0xf]
    %v148 = vld [vmem:[#allocation8 + $0x18] sm:$0xf]
    %v149 = vld [vmem:[#allocation8 + $0x1c] sm:$0xf]
    %v150 = vld [vmem:[#allocation8 + $0x20] sm:$0xf]
    %v151 = vld [vmem:[#allocation8 + $0x24] sm:$0xf]
    %v152 = vld [vmem:[#allocation8 + $0x28] sm:$0xf]
    %v153 = vld [vmem:[#allocation8 + $0x2c] sm:$0xf]
    %v154 = vld [vmem:[#allocation8 + $0x30] sm:$0xf]
    %v155 = vld [vmem:[#allocation8 + $0x34] sm:$0xf]
    %v156 = vld [vmem:[#allocation8 + $0x38] sm:$0xf]
    %v157 = vld [vmem:[#allocation8 + $0x3c] sm:$0xf]
    %v158 = vld [vmem:[%s4] sm:$0x1]
    %v160 = vperm.slane %v158, 0
    %v178 = vunpack.c.l.b16 %v142
    %v179 = vunpack.c.l.b16 %v143
    %v180 = vunpack.c.l.b16 %v144
    %v181 = vunpack.c.l.b16 %v145
    %v182 = vunpack.c.l.b16 %v146
    %v183 = vunpack.c.l.b16 %v147
    %v184 = vunpack.c.l.b16 %v148
    %v185 = vunpack.c.l.b16 %v149
    %v186 = vunpack.c.l.b16 %v150
    %v187 = vunpack.c.l.b16 %v151
    %v188 = vunpack.c.l.b16 %v152
    %v189 = vunpack.c.l.b16 %v153
    %v190 = vunpack.c.l.b16 %v154
    %v191 = vunpack.c.l.b16 %v155
    %v192 = vunpack.c.l.b16 %v156
    %v193 = vunpack.c.l.b16 %v157
    %v194 = vpack.c.b16 %v179, %v178
    %v195 = vpack.c.b16 %v181, %v180
    %v196 = vpack.c.b16 %v183, %v182
    %v197 = vpack.c.b16 %v185, %v184
    %v198 = vpack.c.b16 %v187, %v186
    %v199 = vpack.c.b16 %v189, %v188
    %v200 = vpack.c.b16 %v191, %v190
    %v201 = vpack.c.b16 %v193, %v192
    %210 = vmatpush.bf16.msra.mxu0 %v201
    %211 = vmatpush.bf16.msra.mxu0 %v200
    %212 = vmatpush.bf16.msra.mxu0 %v199
    %213 = vmatpush.bf16.msra.mxu0 %v198
    %214 = vmatpush.bf16.msra.mxu0 %v197
    %215 = vmatpush.bf16.msra.mxu0 %v196
    %216 = vmatpush.bf16.msra.mxu0 %v195
    %217 = vmatpush.bf16.msra.mxu0 %v194
    %218 = vmatmul.bf16.gmra.mxu0 %v141
    %v219 = vpop.f32.mrf.mxu0
    %v220 = vadd.f32 %v160, %v219
    %v221 = vpop.f32.mrf.mxu0
    %222 = vdwg.mxu0
    %v223 = vmax.f32 %v220, 0.0
    %v224 = vadd.f32 %v223, %v138
    %v225 = vpack.c.bf16 %v224, %v224
    %s226 = scalar_lea.vmem [#allocation8], 64
    %v227 = vld [vmem:[%s226] sm:$0xf]
    %v228 = vld [vmem:[%s226 + $0x4] sm:$0xf]
    %v229 = vld [vmem:[%s226 + $0x8] sm:$0xf]
    %v230 = vld [vmem:[%s226 + $0xc] sm:$0xf]
    %v231 = vld [vmem:[%s226 + $0x10] sm:$0xf]
    %v232 = vld [vmem:[%s226 + $0x14] sm:$0xf]
    %v233 = vld [vmem:[%s226 + $0x18] sm:$0xf]
    %v234 = vld [vmem:[%s226 + $0x1c] sm:$0xf]
    %v235 = vld [vmem:[%s226 + $0x20] sm:$0xf]
    %v236 = vld [vmem:[%s226 + $0x24] sm:$0xf]
    %v237 = vld [vmem:[%s226 + $0x28] sm:$0xf]
    %v238 = vld [vmem:[%s226 + $0x2c] sm:$0xf]
    %v239 = vld [vmem:[%s226 + $0x30] sm:$0xf]
    %v240 = vld [vmem:[%s226 + $0x34] sm:$0xf]
    %v241 = vld [vmem:[%s226 + $0x38] sm:$0xf]
    %v242 = vld [vmem:[%s226 + $0x3c] sm:$0xf]
    %s243 = scalar_lea.vmem %s4, 1
    %v244 = vld [vmem:[%s243] sm:$0x1]
    %v246 = vperm.slane %v244, 0
    %v264 = vunpack.c.l.b16 %v227
    %v265 = vunpack.c.l.b16 %v228
    %v266 = vunpack.c.l.b16 %v229
    %v267 = vunpack.c.l.b16 %v230
    %v268 = vunpack.c.l.b16 %v231
    %v269 = vunpack.c.l.b16 %v232
    %v270 = vunpack.c.l.b16 %v233
    %v271 = vunpack.c.l.b16 %v234
    %v272 = vunpack.c.l.b16 %v235
    %v273 = vunpack.c.l.b16 %v236
    %v274 = vunpack.c.l.b16 %v237
    %v275 = vunpack.c.l.b16 %v238
    %v276 = vunpack.c.l.b16 %v239
    %v277 = vunpack.c.l.b16 %v240
    %v278 = vunpack.c.l.b16 %v241
    %v279 = vunpack.c.l.b16 %v242
    %v280 = vpack.c.b16 %v265, %v264
    %v281 = vpack.c.b16 %v267, %v266
    %v282 = vpack.c.b16 %v269, %v268
    %v283 = vpack.c.b16 %v271, %v270
    %v284 = vpack.c.b16 %v273, %v272
    %v285 = vpack.c.b16 %v275, %v274
    %v286 = vpack.c.b16 %v277, %v276
    %v287 = vpack.c.b16 %v279, %v278
    %296 = vmatpush.bf16.msra.mxu0 %v287
    %297 = vmatpush.bf16.msra.mxu0 %v286
    %298 = vmatpush.bf16.msra.mxu0 %v285
    %299 = vmatpush.bf16.msra.mxu0 %v284
    %300 = vmatpush.bf16.msra.mxu0 %v283
    %301 = vmatpush.bf16.msra.mxu0 %v282
    %302 = vmatpush.bf16.msra.mxu0 %v281
    %303 = vmatpush.bf16.msra.mxu0 %v280
    %304 = vmatmul.bf16.gmra.mxu0 %v225
    %v305 = vpop.f32.mrf.mxu0
    %v306 = vadd.f32 %v246, %v305
    %v307 = vpop.f32.mrf.mxu0
    %308 = vdwg.mxu0
    %v309 = vmax.f32 %v306, 0.0
    %v310 = vadd.f32 %v309, %v224
    %v311 = vpack.c.bf16 %v310, %v310
    %s312 = scalar_lea.vmem [#allocation8], 128
    %v313 = vld [vmem:[%s312] sm:$0xf]
    %v314 = vld [vmem:[%s312 + $0x4] sm:$0xf]
    %v315 = vld [vmem:[%s312 + $0x8] sm:$0xf]
    %v316 = vld [vmem:[%s312 + $0xc] sm:$0xf]
    %v317 = vld [vmem:[%s312 + $0x10] sm:$0xf]
    %v318 = vld [vmem:[%s312 + $0x14] sm:$0xf]
    %v319 = vld [vmem:[%s312 + $0x18] sm:$0xf]
    %v320 = vld [vmem:[%s312 + $0x1c] sm:$0xf]
    %v321 = vld [vmem:[%s312 + $0x20] sm:$0xf]
    %v322 = vld [vmem:[%s312 + $0x24] sm:$0xf]
    %v323 = vld [vmem:[%s312 + $0x28] sm:$0xf]
    %v324 = vld [vmem:[%s312 + $0x2c] sm:$0xf]
    %v325 = vld [vmem:[%s312 + $0x30] sm:$0xf]
    %v326 = vld [vmem:[%s312 + $0x34] sm:$0xf]
    %v327 = vld [vmem:[%s312 + $0x38] sm:$0xf]
    %v328 = vld [vmem:[%s312 + $0x3c] sm:$0xf]
    %s329 = scalar_lea.vmem %s4, 2
    %v330 = vld [vmem:[%s329] sm:$0x1]
    %v332 = vperm.slane %v330, 0
    %v350 = vunpack.c.l.b16 %v313
    %v351 = vunpack.c.l.b16 %v314
    %v352 = vunpack.c.l.b16 %v315
    %v353 = vunpack.c.l.b16 %v316
    %v354 = vunpack.c.l.b16 %v317
    %v355 = vunpack.c.l.b16 %v318
    %v356 = vunpack.c.l.b16 %v319
    %v357 = vunpack.c.l.b16 %v320
    %v358 = vunpack.c.l.b16 %v321
    %v359 = vunpack.c.l.b16 %v322
    %v360 = vunpack.c.l.b16 %v323
    %v361 = vunpack.c.l.b16 %v324
    %v362 = vunpack.c.l.b16 %v325
    %v363 = vunpack.c.l.b16 %v326
    %v364 = vunpack.c.l.b16 %v327
    %v365 = vunpack.c.l.b16 %v328
    %v366 = vpack.c.b16 %v351, %v350
    %v367 = vpack.c.b16 %v353, %v352
    %v368 = vpack.c.b16 %v355, %v354
    %v369 = vpack.c.b16 %v357, %v356
    %v370 = vpack.c.b16 %v359, %v358
    %v371 = vpack.c.b16 %v361, %v360
    %v372 = vpack.c.b16 %v363, %v362
    %v373 = vpack.c.b16 %v365, %v364
    %382 = vmatpush.bf16.msra.mxu0 %v373
    %383 = vmatpush.bf16.msra.mxu0 %v372
    %384 = vmatpush.bf16.msra.mxu0 %v371
    %385 = vmatpush.bf16.msra.mxu0 %v370
    %386 = vmatpush.bf16.msra.mxu0 %v369
    %387 = vmatpush.bf16.msra.mxu0 %v368
    %388 = vmatpush.bf16.msra.mxu0 %v367
    %389 = vmatpush.bf16.msra.mxu0 %v366
    %390 = vmatmul.bf16.gmra.mxu0 %v311
    %v391 = vpop.f32.mrf.mxu0
    %v392 = vadd.f32 %v332, %v391
    %v393 = vpop.f32.mrf.mxu0
    %394 = vdwg.mxu0
    %v395 = vmax.f32 %v392, 0.0
    %v396 = vadd.f32 %v395, %v310
    %v397 = vpack.c.bf16 %v396, %v396
    %v398 = vld [vmem:[#allocation10] sm:$0xf]
    %v399 = vld [vmem:[#allocation10 + $0x4] sm:$0xf]
    %v400 = vld [vmem:[#allocation10 + $0x8] sm:$0xf]
    %v401 = vld [vmem:[#allocation10 + $0xc] sm:$0xf]
    %v402 = vld [vmem:[#allocation10 + $0x10] sm:$0xf]
    %v403 = vld [vmem:[#allocation10 + $0x14] sm:$0xf]
    %v404 = vld [vmem:[#allocation10 + $0x18] sm:$0xf]
    %v405 = vld [vmem:[#allocation10 + $0x1c] sm:$0xf]
    %v406 = vld [vmem:[#allocation10 + $0x20] sm:$0xf]
    %v407 = vld [vmem:[#allocation10 + $0x24] sm:$0xf]
    %v408 = vld [vmem:[#allocation10 + $0x28] sm:$0xf]
    %v409 = vld [vmem:[#allocation10 + $0x2c] sm:$0xf]
    %v410 = vld [vmem:[#allocation10 + $0x30] sm:$0xf]
    %v411 = vld [vmem:[#allocation10 + $0x34] sm:$0xf]
    %v412 = vld [vmem:[#allocation10 + $0x38] sm:$0xf]
    %v413 = vld [vmem:[#allocation10 + $0x3c] sm:$0xf]
    %v414 = vld [vmem:[%s6] sm:$0x1]
    %v416 = vperm.slane %v414, 0
    %v434 = vunpack.c.l.b16 %v398
    %v435 = vunpack.c.l.b16 %v399
    %v436 = vunpack.c.l.b16 %v400
    %v437 = vunpack.c.l.b16 %v401
    %v438 = vunpack.c.l.b16 %v402
    %v439 = vunpack.c.l.b16 %v403
    %v440 = vunpack.c.l.b16 %v404
    %v441 = vunpack.c.l.b16 %v405
    %v442 = vunpack.c.l.b16 %v406
    %v443 = vunpack.c.l.b16 %v407
    %v444 = vunpack.c.l.b16 %v408
    %v445 = vunpack.c.l.b16 %v409
    %v446 = vunpack.c.l.b16 %v410
    %v447 = vunpack.c.l.b16 %v411
    %v448 = vunpack.c.l.b16 %v412
    %v449 = vunpack.c.l.b16 %v413
    %v450 = vpack.c.b16 %v435, %v434
    %v451 = vpack.c.b16 %v437, %v436
    %v452 = vpack.c.b16 %v439, %v438
    %v453 = vpack.c.b16 %v441, %v440
    %v454 = vpack.c.b16 %v443, %v442
    %v455 = vpack.c.b16 %v445, %v444
    %v456 = vpack.c.b16 %v447, %v446
    %v457 = vpack.c.b16 %v449, %v448
    %466 = vmatpush.bf16.msra.mxu0 %v457
    %467 = vmatpush.bf16.msra.mxu0 %v456
    %468 = vmatpush.bf16.msra.mxu0 %v455
    %469 = vmatpush.bf16.msra.mxu0 %v454
    %470 = vmatpush.bf16.msra.mxu0 %v453
    %471 = vmatpush.bf16.msra.mxu0 %v452
    %472 = vmatpush.bf16.msra.mxu0 %v451
    %473 = vmatpush.bf16.msra.mxu0 %v450
    %474 = vmatmul.bf16.gmra.mxu0 %v397
    %v475 = vpop.f32.mrf.mxu0
    %v476 = vadd.f32 %v416, %v475
    %v477 = vpop.f32.mrf.mxu0
    %478 = vdwg.mxu0
    %v479 = vmul.f32 %v476, %v476
    %480 = vadd.xlane.f32.xlu0 %v479
    %v481 = vpop.xlane.xlu0 %480
    %v482 = vrsqrt.pop %v481
    %v483 = vmul.f32 %v482, %v481
    %v484 = vmul.f32 %v483, %v482
    %v485 = vmul.f32 0.5, %v484
    %v486 = vsub.f32 1.5, %v485
    %v487 = vmul.f32 %v482, %v486
    %vm488 = vweird.f32 %v481
    %vm489 = vweird.f32 %v482
    %vm490 = vmor %vm488, %vm489
    %v491 = vsel %vm490, %v482, %v487
    %v492 = vmul.f32 %v491, 1.4142135
    %v493 = vmul.f32 %v476, %v492
    %494 = vst [vmem:[#allocation11] sm:$0xff] %v493
    // Predicated region
    $region50: #{tpu_custom_call.1} parent=1 // pred_check
      _
    $region51: #{tpu_custom_call.1} parent=1 // pred_check_branch
      %496 = sbr.rel (0) target = $region53
    $region52: #{tpu_custom_call.1} parent=1 // pred_region
      %498 = vsyncadd [#allocation4], 0
      %s500 = sshll.u32 [#allocation11], 4
      %s501 = int_to_ptr.vmem [resolvable:$true] %s500
      %s502 = sshll.u32 %s7, 4
      %s503 = int_to_ptr.hbm [resolvable:$true] %s502
      %505 = dma.vmem_to_hbm [thread:$0]  %s501, 128, %s503, [#allocation4]
    $region53: #{tpu_custom_call.1} parent=1 // pred_fallthru
      _
    // Predicated region
    $region54: #{tpu_custom_call.1} parent=1 // pred_check
      _
    $region55: #{tpu_custom_call.1} parent=1 // pred_check_branch
      %507 = sbr.rel (0) target = $region57
    $region56: #{tpu_custom_call.1} parent=1 // pred_region
      %509 = dma.done [#allocation4], 128
    $region57: #{tpu_custom_call.1} parent=1 // pred_fallthru
      _
    %510 = vsyncpa [#allocation3], 1
    %511 = vsyncpa [#allocation6], 1
    %512 = vsyncpa [#allocation9], 1
    %513 = vsyncpa [#allocation4], 1

</llo_original>
